<compile_context>
chip_gen: v7x
topology: tpu7x:2x2x1
jax: 0.10.0
libtpu: 0.0.40
codegen_flags: <defaults>
</compile_context>

<pallas_src>
import functools

import jax
import jax.numpy as jnp
import numpy as np
from jax.experimental import pallas as pl
from jax.experimental.pallas import tpu as pltpu


def _pe_kernel(x_ref, coef_ref, out_ref, *, res):
    # x_ref   : (tile_n, 1)  raw positions
    # coef_ref: (3, D)       row0 = scale for pos >= 0
    #                        row1 = scale for pos <  0 (flipped-index variant)
    #                        row2 = phase: 0 for even cols, pi/2 for odd cols
    x = jnp.clip(x_ref[...], -res, res)                 # torch.clamp(x, -res, res)
    sp = coef_ref[0:1, :]                               # (1, D)
    sn = coef_ref[1:2, :]                               # (1, D)
    phase = coef_ref[2:3, :]                            # (1, D)
    scale = jnp.where(x >= 0.0, sp, sn)                 # (tile_n, D) via broadcast
    pe = jnp.abs(x) * scale                             # |pos| / res**(2*(emb//2)/D)
    # even cols -> sin(pe), odd cols -> cos(pe) == sin(pe + pi/2): one sin total.
    out_ref[...] = jnp.sin(pe + phase)


def positional_encoding(x, *, d_model=128, max_len=200, tile_n=2048):
    """x: (nsources, nframes, nbatch) -> (nsources, nframes, nbatch, d_model)."""
    ns, nf, nb = x.shape
    n = ns * nf * nb
    x_flat = x.reshape(n, 1).astype(jnp.float32)

    # Host-side (tiny) per-column coefficient table, packed into one array.
    k = np.arange(d_model)
    scale_pos = np.power(float(max_len), -(2.0 * (k // 2)) / d_model)
    scale_neg = np.power(float(max_len), -(2.0 * ((d_model - 1 - k) // 2)) / d_model)
    phase = np.where(k % 2 == 0, 0.0, np.pi / 2.0)
    coef = jnp.asarray(
        np.stack([scale_pos, scale_neg, phase], axis=0), dtype=jnp.float32
    )  # (3, d_model)

    # Tile sizing: big tiles to amortize per-step overhead, sublane-aligned,
    # but never (much) larger than the problem itself.
    tile_n = int(min(tile_n, 8 * pl.cdiv(n, 8)))
    tile_n = max(8, 8 * pl.cdiv(tile_n, 8))
    grid = (pl.cdiv(n, tile_n),)

    out = pl.pallas_call(
        functools.partial(_pe_kernel, res=float(max_len)),
        out_shape=jax.ShapeDtypeStruct((n, d_model), jnp.float32),
        grid=grid,
        in_specs=[
            pl.BlockSpec((tile_n, 1), lambda i: (i, 0)),
            pl.BlockSpec((3, d_model), lambda i: (0, 0)),  # constant block, no re-DMA
        ],
        out_specs=pl.BlockSpec((tile_n, d_model), lambda i: (i, 0)),
        compiler_params=pltpu.CompilerParams(dimension_semantics=("parallel",)),
    )(x_flat, coef)

    return out.reshape(ns, nf, nb, d_model)


if __name__ == "__main__":
    key = jax.random.PRNGKey(0)
    nsources, nframes, nbatch, d_model, max_len = 2, 8, 2, 128, 200

    # Positions in/around [-max_len, max_len] so clamping is exercised.
    x = jax.random.uniform(
        key, (nsources, nframes, nbatch), minval=-250.0, maxval=250.0, dtype=jnp.float32
    )

    out = positional_encoding(x, d_model=d_model, max_len=max_len)
    out = jax.block_until_ready(out)

    # Pure-JAX reference of the PyTorch forward (explicit sin/cos) for verification.
    xr = jnp.clip(x, -float(max_len), float(max_len)).reshape(-1, 1)
    k = jnp.arange(d_model)
    sp = jnp.power(float(max_len), -(2.0 * (k // 2)) / d_model)
    sn = jnp.power(float(max_len), -(2.0 * ((d_model - 1 - k) // 2)) / d_model)
    pe = jnp.abs(xr) * jnp.where(xr >= 0.0, sp[None, :], sn[None, :])
    ref = jnp.where((k % 2) == 0, jnp.sin(pe), jnp.cos(pe)).reshape(
        nsources, nframes, nbatch, d_model
    )
    # atol 2e-5: kernel uses sin(pe + pi/2) for odd cols; the f32 rounding of
    # (pe + pi/2) at |pe| up to 200 contributes up to ~8e-6 vs direct cos(pe).
    np.testing.assert_allclose(np.asarray(out), np.asarray(ref), rtol=1e-5, atol=2e-5)

    print("KERNEL_OK")
</pallas_src>

<mosaic_0001>
module attributes {stable_mosaic.version = 11 : i64} {
  func.func @_pe_kernel(%arg0: i32, %arg1: memref<32x1xf32, #tpu.memory_space<vmem>>, %arg2: memref<3x128xf32, #tpu.memory_space<vmem>>, %arg3: memref<32x128xf32, #tpu.memory_space<vmem>>) attributes {dimension_semantics = [#tpu.dimension_semantics<parallel>], iteration_bounds = array<i64: 1>, scalar_prefetch = 0 : i64, scratch_operands = 0 : i64, tpu.core_type = #tpu.core_type<tc>, window_params = [{transform_indices = @transform_0, window_bounds = array<i64: 32, 1>}, {pipeline_mode = #tpu.pipeline_mode<synchronous>, transform_indices = @transform_1, window_bounds = array<i64: 3, 128>}, {transform_indices = @transform_2, window_bounds = array<i64: 32, 128>}]} {
    %c0 = arith.constant 0 : index
    %c0_0 = arith.constant 0 : index
    %0 = vector.load %arg1[%c0, %c0_0] : memref<32x1xf32, #tpu.memory_space<vmem>>, vector<32x1xf32>
    %cst = arith.constant -2.000000e+02 : f32
    %cst_1 = arith.constant 2.000000e+02 : f32
    %1 = vector.broadcast %cst : f32 to vector<32x1xf32>
    %2 = arith.maximumf %1, %0 : vector<32x1xf32>
    %3 = vector.broadcast %cst_1 : f32 to vector<32x1xf32>
    %4 = arith.minimumf %3, %2 : vector<32x1xf32>
    %c0_2 = arith.constant 0 : index
    %c0_3 = arith.constant 0 : index
    %5 = vector.load %arg2[%c0_2, %c0_3] : memref<3x128xf32, #tpu.memory_space<vmem>>, vector<1x128xf32>
    %c1 = arith.constant 1 : index
    %c0_4 = arith.constant 0 : index
    %6 = vector.load %arg2[%c1, %c0_4] : memref<3x128xf32, #tpu.memory_space<vmem>>, vector<1x128xf32>
    %c2 = arith.constant 2 : index
    %c0_5 = arith.constant 0 : index
    %7 = vector.load %arg2[%c2, %c0_5] : memref<3x128xf32, #tpu.memory_space<vmem>>, vector<1x128xf32>
    %cst_6 = arith.constant 0.000000e+00 : f32
    %8 = vector.broadcast %cst_6 : f32 to vector<32x1xf32>
    %9 = arith.cmpf oge, %4, %8 : vector<32x1xf32>
    %10 = vector.shape_cast %9 : vector<32x1xi1> to vector<32x1xi1>
    %11 = vector.broadcast %10 : vector<32x1xi1> to vector<32x128xi1>
    %12 = vector.shape_cast %5 : vector<1x128xf32> to vector<1x128xf32>
    %13 = vector.broadcast %12 : vector<1x128xf32> to vector<32x128xf32>
    %14 = vector.shape_cast %6 : vector<1x128xf32> to vector<1x128xf32>
    %15 = vector.broadcast %14 : vector<1x128xf32> to vector<32x128xf32>
    %16 = arith.select %11, %13, %15 : vector<32x128xi1>, vector<32x128xf32>
    %17 = math.absf %4 : vector<32x1xf32>
    %18 = vector.broadcast %17 : vector<32x1xf32> to vector<32x128xf32>
    %19 = arith.mulf %18, %16 : vector<32x128xf32>
    %20 = vector.broadcast %7 : vector<1x128xf32> to vector<32x128xf32>
    %21 = arith.addf %19, %20 : vector<32x128xf32>
    %22 = math.sin %21 : vector<32x128xf32>
    %c0_7 = arith.constant 0 : index
    %c0_8 = arith.constant 0 : index
    %23 = vector.load %arg3[%c0_7, %c0_8] : memref<32x128xf32, #tpu.memory_space<vmem>>, vector<32x128xf32>
    tpu.vector_store %arg3[%c0_7, %c0_8], %22 {strides = array<i32>} : memref<32x128xf32, #tpu.memory_space<vmem>>, vector<32x128xf32>,
    return
  }
  func.func @transform_0(%arg0: i32) -> (i32, i32) {
    %c0_i32 = arith.constant 0 : i32
    %c0_i32_0 = arith.constant 0 : i32
    return %arg0, %c0_i32 : i32, i32
  }
  func.func @transform_1(%arg0: i32) -> (i32, i32) {
    %c0_i32 = arith.constant 0 : i32
    %c0_i32_0 = arith.constant 0 : i32
    %c0_i32_1 = arith.constant 0 : i32
    return %c0_i32, %c0_i32_0 : i32, i32
  }
  func.func @transform_2(%arg0: i32) -> (i32, i32) {
    %c0_i32 = arith.constant 0 : i32
    %c0_i32_0 = arith.constant 0 : i32
    return %arg0, %c0_i32 : i32, i32
  }
}

</mosaic_0001>

<llo_original>
// kernel: tpu_custom_call.1
$region0: #{tpu_custom_call.1}
  #allocation0 [shape = 'u32[]', space=smem, size = 0x4, offset = 0x4, fixed_abs, tag = 'smem constant byte address 0x4 - core index']
  #allocation1 [shape = 'u32[144,128]{1,0:T(1,128)}', space=vmem, size = 0x12000, scoped, tag = 'internal scratch']
  %s0 = inlined_call_operand.vmem [shape: f32[32,1], index: 0, kind: input, shape index: {}]
  %s1 = inlined_call_operand.vmem [shape: f32[3,128], index: 1, kind: input, shape index: {}]
  %s2 = inlined_call_operand.hbm [shape: f32[32,128], index: 2, kind: output, shape index: {}]
  %s3 = sld [smem:[#allocation0]]
  $region18: #{tpu_custom_call.1} parent=0
    _
  %s5 = ssub.s32 1, %s3
  %s6 = scalar_select 0, %s5, %s3
  $region1: #{tpu_custom_call.1} parent=0
    #allocation2 [shape = 'u8[16384]{0}', space=vmem, size = 0x4000, scoped, tag = 'output window, operand 0, single buffered']
    #allocation3 [shape = 's32[1]{0}', space=sflag, size = 0x4, scoped, tag = 'scoped memory for tpu_custom_call.1']
    %7 = vsyncpa [#allocation3], 0
    // Predicated region
    $region2: #{tpu_custom_call.1} parent=1 // pred_check
      _
    $region3: #{tpu_custom_call.1} parent=1 // pred_check_branch
      %9 = sbr.rel (0) target = $region5
    $region4: #{tpu_custom_call.1} parent=1 // pred_region
      _
    $region5: #{tpu_custom_call.1} parent=1 // pred_fallthru
      _
    // Predicated region
    $region6: #{tpu_custom_call.1} parent=1 // pred_check
      _
    $region7: #{tpu_custom_call.1} parent=1 // pred_check_branch
      %11 = sbr.rel (0) target = $region9
    $region8: #{tpu_custom_call.1} parent=1 // pred_region
      _
    $region9: #{tpu_custom_call.1} parent=1 // pred_fallthru
      _
    %v12 = vld [vmem:[%s0] sm:$0xff]
    %v13 = vld [vmem:[%s0 + $0x8] sm:$0xff]
    %v14 = vld [vmem:[%s0 + $0x10] sm:$0xff]
    %v15 = vld [vmem:[%s0 + $0x18] sm:$0xff]
    %v16 = vmax.f32 %v12, -200.0
    %v17 = vmax.f32 %v13, -200.0
    %v18 = vmax.f32 %v14, -200.0
    %v19 = vmax.f32 %v15, -200.0
    %v20 = vmin.f32 %v16, 200.0
    %v21 = vmin.f32 %v17, 200.0
    %v22 = vmin.f32 %v18, 200.0
    %v23 = vmin.f32 %v19, 200.0
    %v24 = vld [vmem:[%s1] sm:$0x1]
    %v25 = vld [vmem:[%s1 + $0x1] sm:$0x1]
    %v26 = vld [vmem:[%s1 + $0x2] sm:$0x1]
    %vm27 = vcmp.ge.f32.partialorder %v20, 0.0
    %vm28 = vcmp.ge.f32.partialorder %v21, 0.0
    %vm29 = vcmp.ge.f32.partialorder %v22, 0.0
    %vm30 = vcmp.ge.f32.partialorder %v23, 0.0
    %v31 = vsel %vm27, 1, 0
    %v32 = vsel %vm28, 1, 0
    %v33 = vsel %vm29, 1, 0
    %v34 = vsel %vm30, 1, 0
    %35 = vset.pattern.permute.xlu0 0
    %36 = vperm.xlu0 %35, %v31
    %v37 = vpop.permute.xlu0 %36
    %38 = vset.pattern.permute.xlu0 0
    %39 = vperm.xlu0 %38, %v32
    %v40 = vpop.permute.xlu0 %39
    %41 = vset.pattern.permute.xlu0 0
    %42 = vperm.xlu0 %41, %v33
    %v43 = vpop.permute.xlu0 %42
    %44 = vset.pattern.permute.xlu0 0
    %45 = vperm.xlu0 %44, %v34
    %v46 = vpop.permute.xlu0 %45
    %vm47 = vcmp.eq.s32.totalorder %v37, 1
    %vm48 = vcmp.eq.s32.totalorder %v40, 1
    %vm49 = vcmp.eq.s32.totalorder %v43, 1
    %vm50 = vcmp.eq.s32.totalorder %v46, 1
    %v51 = vlaneseq
    %v52 = vshrl.u32 %v51, 7
    %v53 = vsub.s32 0, %v52
    %v54 = vrot.slane %v24, %v53
    %v55 = vlaneseq
    %v56 = vshrl.u32 %v55, 7
    %v57 = vsub.s32 0, %v56
    %v58 = vrot.slane %v25, %v57
    %v59 = vsel %vm47, %v54, %v58
    %v60 = vsel %vm48, %v54, %v58
    %v61 = vsel %vm49, %v54, %v58
    %v62 = vsel %vm50, %v54, %v58
    %v63 = vand.u32 2147483647, %v20
    %v64 = vand.u32 2147483647, %v21
    %v65 = vand.u32 2147483647, %v22
    %v66 = vand.u32 2147483647, %v23
    %68 = vset.pattern.permute.xlu0 0
    %69 = vperm.xlu0 %68, %v63
    %v70 = vpop.permute.xlu0 %69
    %73 = vset.pattern.permute.xlu0 0
    %74 = vperm.xlu0 %73, %v64
    %v75 = vpop.permute.xlu0 %74
    %78 = vset.pattern.permute.xlu0 0
    %79 = vperm.xlu0 %78, %v65
    %v80 = vpop.permute.xlu0 %79
    %83 = vset.pattern.permute.xlu0 0
    %84 = vperm.xlu0 %83, %v66
    %v85 = vpop.permute.xlu0 %84
    %v87 = vmul.f32 %v70, %v59
    %v88 = vmul.f32 %v75, %v60
    %v89 = vmul.f32 %v80, %v61
    %v90 = vmul.f32 %v85, %v62
    %v91 = vlaneseq
    %v92 = vshrl.u32 %v91, 7
    %v93 = vsub.s32 0, %v92
    %v94 = vrot.slane %v26, %v93
    %v95 = vadd.f32 %v87, %v94
    %v96 = vadd.f32 %v88, %v94
    %v97 = vadd.f32 %v89, %v94
    %v98 = vadd.f32 %v90, %v94
    %v99 = vand.u32 2147483647, %v95
    %vm100 = vcmp.le.f32.partialorder %v99, 0.7853982
    %vm101 = vcmp.lt.s32.totalorder %v95, 0
    %v102 = vand.u32 %v95, 2139095040
    %v103 = vshrl.u32 %v102, 23
    %v104 = vsub.s32 %v103, 127
    %v105 = vand.u32 2147483647, %v95
    %v106 = vand.u32 %v105, 8388607
    %v107 = vor.u32 %v106, 8388608
    %v108 = vsub.s32 0, %v107
    %v109 = vadd.s32 %v104, 1
    %vm110 = vcmp.gt.s32.totalorder %v109, 0
    %v111 = vsel %vm110, %v109, 0
    %v112 = vshrl.u32 %v111, 5
    %v113 = vand.u32 %v111, 31
    %v114 = vsub.s32 32, %v113
    %v115 = vshrl.u32 683565275, %v114
    %v116 = vshll.u32 683565275, %v113
    %v117 = vshrl.u32 2475754826, %v114
    %v118 = vor.u32 %v116, %v117
    %v119 = vshll.u32 2475754826, %v113
    %v120 = vshrl.u32 2131351028, %v114
    %v121 = vor.u32 %v119, %v120
    %v122 = vshll.u32 2131351028, %v113
    %v123 = vshrl.u32 2102212464, %v114
    %v124 = vor.u32 %v122, %v123
    %v125 = vshll.u32 2102212464, %v113
    %v126 = vshrl.u32 920167782, %v114
    %v127 = vor.u32 %v125, %v126
    %v128 = vshll.u32 920167782, %v113
    %v129 = vshrl.u32 1326507024, %v114
    %v130 = vor.u32 %v128, %v129
    %vm131 = vcmp.lt.s32.totalorder %v112, 1
    %vm132 = vcmp.lt.s32.totalorder %v112, 2
    %vm133 = vcmp.lt.s32.totalorder %v112, 3
    %vm134 = vcmp.lt.s32.totalorder %v112, 4
    %v135 = vsel %vm131, %v115, %v118
    %v136 = vsel %vm134, %v124, 2102212464
    %v137 = vsel %vm133, %v121, %v136
    %v138 = vsel %vm132, %v135, %v137
    %v139 = vsel %vm131, %v118, %v121
    %v140 = vsel %vm134, %v127, 920167782
    %v141 = vsel %vm133, %v124, %v140
    %v142 = vsel %vm132, %v139, %v141
    %v143 = vsel %vm131, %v121, %v124
    %v144 = vsel %vm134, %v130, 1326507024
    %v145 = vsel %vm133, %v127, %v144
    %v146 = vsel %vm132, %v143, %v145
    %v147 = vshll.u32 %v107, 8
    %v148 = vmul.u32.u64.compose %v147, %v146
    %v149 = vextract.low.u32 %v148
    %v150 = vextract.high.u32 %v148
    %v151 = vmul.u32.u64.compose %v147, %v142
    %v152 = vextract.low.u32 %v151
    %v153 = vextract.high.u32 %v151
    %v154 = vmul.u32 %v147, %v138
    %v155 = vadd.s32 %v150, %v152
    %vm156 = vc.u32 %v150, %v152
    %v157 = vadd.s32 %v153, 1
    %v158 = vsel %vm156, %v157, %v153
    %v159 = vadd.s32 %v154, %v158
    %v160 = vadd.s32 %v159, 536870912
    %v161 = vshrl.u32 %v160, 30
    %v162 = vshll.u32 %v161, 30
    %v163 = vsub.s32 %v159, %v162
    %vm164 = vcmp.lt.s32.totalorder %v163, 0
    %v165 = vsub.s32 0, %v163
    %v166 = vsel %vm164, %v165, %v163
    %v167 = vclz %v166
    %v168 = vsub.s32 %v167, 2
    %vm169 = vcmp.gt.s32.totalorder 0, %v168
    %v170 = vsel %vm169, 0, %v168
    %v171 = vsub.s32 32, %v170
    %v172 = vshll.u32 %v163, %v170
    %v173 = vshrl.u32 %v155, %v171
    %v174 = vor.u32 %v172, %v173
    %v175 = vsub.s32 4294967266, %v170
    %v176 = vadd.s32 %v175, 127
    %v177 = vshll.u32 %v176, 23
    %v178 = vor.u32 4788187, %v177
    %v179 = vand.u32 2147483647, %v178
    %v181 = vcvt.s32.f32 %v174
    %v182 = vmul.f32 %v181, %v179
    %v183 = vxor.u32 %v182, 2147483648
    %v184 = vsel %vm101, %v183, %v182
    %v185 = vsub.s32 4, %v161
    %v186 = vsel %vm101, %v185, %v161
    %v187 = vsel %vm100, %v95, %v184
    %v188 = vsel %vm100, 0, %v186
    %v189 = vcosq.f32.pop %v187
    %v190 = vsinq.f32.pop %v187
    %vm191 = vweird.f32 %v95
    %v192 = vadd.s32 %v188, 3
    %v193 = vand.u32 %v192, 3
    %vm194 = vcmp.lt.s32.totalorder %v193, 2
    %vm195 = vcmp.eq.s32.totalorder %v193, 0
    %v196 = vxor.u32 %v190, 2147483648
    %v197 = vsel %vm195, %v189, %v196
    %vm198 = vcmp.eq.s32.totalorder %v193, 2
    %v199 = vxor.u32 %v189, 2147483648
    %v200 = vsel %vm198, %v199, %v190
    %v201 = vsel %vm194, %v197, %v200
    %v202 = vsel %vm191, nan, %v201
    %v203 = vand.u32 2147483647, %v96
    %vm204 = vcmp.le.f32.partialorder %v203, 0.7853982
    %vm205 = vcmp.lt.s32.totalorder %v96, 0
    %v206 = vand.u32 %v96, 2139095040
    %v207 = vshrl.u32 %v206, 23
    %v208 = vsub.s32 %v207, 127
    %v209 = vand.u32 2147483647, %v96
    %v210 = vand.u32 %v209, 8388607
    %v211 = vor.u32 %v210, 8388608
    %v212 = vsub.s32 0, %v211
    %v213 = vadd.s32 %v208, 1
    %vm214 = vcmp.gt.s32.totalorder %v213, 0
    %v215 = vsel %vm214, %v213, 0
    %v216 = vshrl.u32 %v215, 5
    %v217 = vand.u32 %v215, 31
    %v218 = vsub.s32 32, %v217
    %v219 = vshrl.u32 683565275, %v218
    %v220 = vshll.u32 683565275, %v217
    %v221 = vshrl.u32 2475754826, %v218
    %v222 = vor.u32 %v220, %v221
    %v223 = vshll.u32 2475754826, %v217
    %v224 = vshrl.u32 2131351028, %v218
    %v225 = vor.u32 %v223, %v224
    %v226 = vshll.u32 2131351028, %v217
    %v227 = vshrl.u32 2102212464, %v218
    %v228 = vor.u32 %v226, %v227
    %v229 = vshll.u32 2102212464, %v217
    %v230 = vshrl.u32 920167782, %v218
    %v231 = vor.u32 %v229, %v230
    %v232 = vshll.u32 920167782, %v217
    %v233 = vshrl.u32 1326507024, %v218
    %v234 = vor.u32 %v232, %v233
    %vm235 = vcmp.lt.s32.totalorder %v216, 1
    %vm236 = vcmp.lt.s32.totalorder %v216, 2
    %vm237 = vcmp.lt.s32.totalorder %v216, 3
    %vm238 = vcmp.lt.s32.totalorder %v216, 4
    %v239 = vsel %vm235, %v219, %v222
    %v240 = vsel %vm238, %v228, 2102212464
    %v241 = vsel %vm237, %v225, %v240
    %v242 = vsel %vm236, %v239, %v241
    %v243 = vsel %vm235, %v222, %v225
    %v244 = vsel %vm238, %v231, 920167782
    %v245 = vsel %vm237, %v228, %v244
    %v246 = vsel %vm236, %v243, %v245
    %v247 = vsel %vm235, %v225, %v228
    %v248 = vsel %vm238, %v234, 1326507024
    %v249 = vsel %vm237, %v231, %v248
    %v250 = vsel %vm236, %v247, %v249
    %v251 = vshll.u32 %v211, 8
    %v252 = vmul.u32.u64.compose %v251, %v250
    %v253 = vextract.low.u32 %v252
    %v254 = vextract.high.u32 %v252
    %v255 = vmul.u32.u64.compose %v251, %v246
    %v256 = vextract.low.u32 %v255
    %v257 = vextract.high.u32 %v255
    %v258 = vmul.u32 %v251, %v242
    %v259 = vadd.s32 %v254, %v256
    %vm260 = vc.u32 %v254, %v256
    %v261 = vadd.s32 %v257, 1
    %v262 = vsel %vm260, %v261, %v257
    %v263 = vadd.s32 %v258, %v262
    %v264 = vadd.s32 %v263, 536870912
    %v265 = vshrl.u32 %v264, 30
    %v266 = vshll.u32 %v265, 30
    %v267 = vsub.s32 %v263, %v266
    %vm268 = vcmp.lt.s32.totalorder %v267, 0
    %v269 = vsub.s32 0, %v267
    %v270 = vsel %vm268, %v269, %v267
    %v271 = vclz %v270
    %v272 = vsub.s32 %v271, 2
    %vm273 = vcmp.gt.s32.totalorder 0, %v272
    %v274 = vsel %vm273, 0, %v272
    %v275 = vsub.s32 32, %v274
    %v276 = vshll.u32 %v267, %v274
    %v277 = vshrl.u32 %v259, %v275
    %v278 = vor.u32 %v276, %v277
    %v279 = vsub.s32 4294967266, %v274
    %v280 = vadd.s32 %v279, 127
    %v281 = vshll.u32 %v280, 23
    %v282 = vor.u32 4788187, %v281
    %v283 = vand.u32 2147483647, %v282
    %v285 = vcvt.s32.f32 %v278
    %v286 = vmul.f32 %v285, %v283
    %v287 = vxor.u32 %v286, 2147483648
    %v288 = vsel %vm205, %v287, %v286
    %v289 = vsub.s32 4, %v265
    %v290 = vsel %vm205, %v289, %v265
    %v291 = vsel %vm204, %v96, %v288
    %v292 = vsel %vm204, 0, %v290
    %v293 = vcosq.f32.pop %v291
    %v294 = vsinq.f32.pop %v291
    %vm295 = vweird.f32 %v96
    %v296 = vadd.s32 %v292, 3
    %v297 = vand.u32 %v296, 3
    %vm298 = vcmp.lt.s32.totalorder %v297, 2
    %vm299 = vcmp.eq.s32.totalorder %v297, 0
    %v300 = vxor.u32 %v294, 2147483648
    %v301 = vsel %vm299, %v293, %v300
    %vm302 = vcmp.eq.s32.totalorder %v297, 2
    %v303 = vxor.u32 %v293, 2147483648
    %v304 = vsel %vm302, %v303, %v294
    %v305 = vsel %vm298, %v301, %v304
    %v306 = vsel %vm295, nan, %v305
    %v307 = vand.u32 2147483647, %v97
    %vm308 = vcmp.le.f32.partialorder %v307, 0.7853982
    %vm309 = vcmp.lt.s32.totalorder %v97, 0
    %v310 = vand.u32 %v97, 2139095040
    %v311 = vshrl.u32 %v310, 23
    %v312 = vsub.s32 %v311, 127
    %v313 = vand.u32 2147483647, %v97
    %v314 = vand.u32 %v313, 8388607
    %v315 = vor.u32 %v314, 8388608
    %v316 = vsub.s32 0, %v315
    %v317 = vadd.s32 %v312, 1
    %vm318 = vcmp.gt.s32.totalorder %v317, 0
    %v319 = vsel %vm318, %v317, 0
    %v320 = vshrl.u32 %v319, 5
    %v321 = vand.u32 %v319, 31
    %v322 = vsub.s32 32, %v321
    %v323 = vshrl.u32 683565275, %v322
    %v324 = vshll.u32 683565275, %v321
    %v325 = vshrl.u32 2475754826, %v322
    %v326 = vor.u32 %v324, %v325
    %v327 = vshll.u32 2475754826, %v321
    %v328 = vshrl.u32 2131351028, %v322
    %v329 = vor.u32 %v327, %v328
    %v330 = vshll.u32 2131351028, %v321
    %v331 = vshrl.u32 2102212464, %v322
    %v332 = vor.u32 %v330, %v331
    %v333 = vshll.u32 2102212464, %v321
    %v334 = vshrl.u32 920167782, %v322
    %v335 = vor.u32 %v333, %v334
    %v336 = vshll.u32 920167782, %v321
    %v337 = vshrl.u32 1326507024, %v322
    %v338 = vor.u32 %v336, %v337
    %vm339 = vcmp.lt.s32.totalorder %v320, 1
    %vm340 = vcmp.lt.s32.totalorder %v320, 2
    %vm341 = vcmp.lt.s32.totalorder %v320, 3
    %vm342 = vcmp.lt.s32.totalorder %v320, 4
    %v343 = vsel %vm339, %v323, %v326
    %v344 = vsel %vm342, %v332, 2102212464
    %v345 = vsel %vm341, %v329, %v344
    %v346 = vsel %vm340, %v343, %v345
    %v347 = vsel %vm339, %v326, %v329
    %v348 = vsel %vm342, %v335, 920167782
    %v349 = vsel %vm341, %v332, %v348
    %v350 = vsel %vm340, %v347, %v349
    %v351 = vsel %vm339, %v329, %v332
    %v352 = vsel %vm342, %v338, 1326507024
    %v353 = vsel %vm341, %v335, %v352
    %v354 = vsel %vm340, %v351, %v353
    %v355 = vshll.u32 %v315, 8
    %v356 = vmul.u32.u64.compose %v355, %v354
    %v357 = vextract.low.u32 %v356
    %v358 = vextract.high.u32 %v356
    %v359 = vmul.u32.u64.compose %v355, %v350
    %v360 = vextract.low.u32 %v359
    %v361 = vextract.high.u32 %v359
    %v362 = vmul.u32 %v355, %v346
    %v363 = vadd.s32 %v358, %v360
    %vm364 = vc.u32 %v358, %v360
    %v365 = vadd.s32 %v361, 1
    %v366 = vsel %vm364, %v365, %v361
    %v367 = vadd.s32 %v362, %v366
    %v368 = vadd.s32 %v367, 536870912
    %v369 = vshrl.u32 %v368, 30
    %v370 = vshll.u32 %v369, 30
    %v371 = vsub.s32 %v367, %v370
    %vm372 = vcmp.lt.s32.totalorder %v371, 0
    %v373 = vsub.s32 0, %v371
    %v374 = vsel %vm372, %v373, %v371
    %v375 = vclz %v374
    %v376 = vsub.s32 %v375, 2
    %vm377 = vcmp.gt.s32.totalorder 0, %v376
    %v378 = vsel %vm377, 0, %v376
    %v379 = vsub.s32 32, %v378
    %v380 = vshll.u32 %v371, %v378
    %v381 = vshrl.u32 %v363, %v379
    %v382 = vor.u32 %v380, %v381
    %v383 = vsub.s32 4294967266, %v378
    %v384 = vadd.s32 %v383, 127
    %v385 = vshll.u32 %v384, 23
    %v386 = vor.u32 4788187, %v385
    %v387 = vand.u32 2147483647, %v386
    %v389 = vcvt.s32.f32 %v382
    %v390 = vmul.f32 %v389, %v387
    %v391 = vxor.u32 %v390, 2147483648
    %v392 = vsel %vm309, %v391, %v390
    %v393 = vsub.s32 4, %v369
    %v394 = vsel %vm309, %v393, %v369
    %v395 = vsel %vm308, %v97, %v392
    %v396 = vsel %vm308, 0, %v394
    %v397 = vcosq.f32.pop %v395
    %v398 = vsinq.f32.pop %v395
    %vm399 = vweird.f32 %v97
    %v400 = vadd.s32 %v396, 3
    %v401 = vand.u32 %v400, 3
    %vm402 = vcmp.lt.s32.totalorder %v401, 2
    %vm403 = vcmp.eq.s32.totalorder %v401, 0
    %v404 = vxor.u32 %v398, 2147483648
    %v405 = vsel %vm403, %v397, %v404
    %vm406 = vcmp.eq.s32.totalorder %v401, 2
    %v407 = vxor.u32 %v397, 2147483648
    %v408 = vsel %vm406, %v407, %v398
    %v409 = vsel %vm402, %v405, %v408
    %v410 = vsel %vm399, nan, %v409
    %v411 = vand.u32 2147483647, %v98
    %vm412 = vcmp.le.f32.partialorder %v411, 0.7853982
    %vm413 = vcmp.lt.s32.totalorder %v98, 0
    %v414 = vand.u32 %v98, 2139095040
    %v415 = vshrl.u32 %v414, 23
    %v416 = vsub.s32 %v415, 127
    %v417 = vand.u32 2147483647, %v98
    %v418 = vand.u32 %v417, 8388607
    %v419 = vor.u32 %v418, 8388608
    %v420 = vsub.s32 0, %v419
    %v421 = vadd.s32 %v416, 1
    %vm422 = vcmp.gt.s32.totalorder %v421, 0
    %v423 = vsel %vm422, %v421, 0
    %v424 = vshrl.u32 %v423, 5
    %v425 = vand.u32 %v423, 31
    %v426 = vsub.s32 32, %v425
    %v427 = vshrl.u32 683565275, %v426
    %v428 = vshll.u32 683565275, %v425
    %v429 = vshrl.u32 2475754826, %v426
    %v430 = vor.u32 %v428, %v429
    %v431 = vshll.u32 2475754826, %v425
    %v432 = vshrl.u32 2131351028, %v426
    %v433 = vor.u32 %v431, %v432
    %v434 = vshll.u32 2131351028, %v425
    %v435 = vshrl.u32 2102212464, %v426
    %v436 = vor.u32 %v434, %v435
    %v437 = vshll.u32 2102212464, %v425
    %v438 = vshrl.u32 920167782, %v426
    %v439 = vor.u32 %v437, %v438
    %v440 = vshll.u32 920167782, %v425
    %v441 = vshrl.u32 1326507024, %v426
    %v442 = vor.u32 %v440, %v441
    %vm443 = vcmp.lt.s32.totalorder %v424, 1
    %vm444 = vcmp.lt.s32.totalorder %v424, 2
    %vm445 = vcmp.lt.s32.totalorder %v424, 3
    %vm446 = vcmp.lt.s32.totalorder %v424, 4
    %v447 = vsel %vm443, %v427, %v430
    %v448 = vsel %vm446, %v436, 2102212464
    %v449 = vsel %vm445, %v433, %v448
    %v450 = vsel %vm444, %v447, %v449
    %v451 = vsel %vm443, %v430, %v433
    %v452 = vsel %vm446, %v439, 920167782
    %v453 = vsel %vm445, %v436, %v452
    %v454 = vsel %vm444, %v451, %v453
    %v455 = vsel %vm443, %v433, %v436
    %v456 = vsel %vm446, %v442, 1326507024
    %v457 = vsel %vm445, %v439, %v456
    %v458 = vsel %vm444, %v455, %v457
    %v459 = vshll.u32 %v419, 8
    %v460 = vmul.u32.u64.compose %v459, %v458
    %v461 = vextract.low.u32 %v460
    %v462 = vextract.high.u32 %v460
    %v463 = vmul.u32.u64.compose %v459, %v454
    %v464 = vextract.low.u32 %v463
    %v465 = vextract.high.u32 %v463
    %v466 = vmul.u32 %v459, %v450
    %v467 = vadd.s32 %v462, %v464
    %vm468 = vc.u32 %v462, %v464
    %v469 = vadd.s32 %v465, 1
    %v470 = vsel %vm468, %v469, %v465
    %v471 = vadd.s32 %v466, %v470
    %v472 = vadd.s32 %v471, 536870912
    %v473 = vshrl.u32 %v472, 30
    %v474 = vshll.u32 %v473, 30
    %v475 = vsub.s32 %v471, %v474
    %vm476 = vcmp.lt.s32.totalorder %v475, 0
    %v477 = vsub.s32 0, %v475
    %v478 = vsel %vm476, %v477, %v475
    %v479 = vclz %v478
    %v480 = vsub.s32 %v479, 2
    %vm481 = vcmp.gt.s32.totalorder 0, %v480
    %v482 = vsel %vm481, 0, %v480
    %v483 = vsub.s32 32, %v482
    %v484 = vshll.u32 %v475, %v482
    %v485 = vshrl.u32 %v467, %v483
    %v486 = vor.u32 %v484, %v485
    %v487 = vsub.s32 4294967266, %v482
    %v488 = vadd.s32 %v487, 127
    %v489 = vshll.u32 %v488, 23
    %v490 = vor.u32 4788187, %v489
    %v491 = vand.u32 2147483647, %v490
    %v493 = vcvt.s32.f32 %v486
    %v494 = vmul.f32 %v493, %v491
    %v495 = vxor.u32 %v494, 2147483648
    %v496 = vsel %vm413, %v495, %v494
    %v497 = vsub.s32 4, %v473
    %v498 = vsel %vm413, %v497, %v473
    %v499 = vsel %vm412, %v98, %v496
    %v500 = vsel %vm412, 0, %v498
    %v501 = vcosq.f32.pop %v499
    %v502 = vsinq.f32.pop %v499
    %vm503 = vweird.f32 %v98
    %v504 = vadd.s32 %v500, 3
    %v505 = vand.u32 %v504, 3
    %vm506 = vcmp.lt.s32.totalorder %v505, 2
    %vm507 = vcmp.eq.s32.totalorder %v505, 0
    %v508 = vxor.u32 %v502, 2147483648
    %v509 = vsel %vm507, %v501, %v508
    %vm510 = vcmp.eq.s32.totalorder %v505, 2
    %v511 = vxor.u32 %v501, 2147483648
    %v512 = vsel %vm510, %v511, %v502
    %v513 = vsel %vm506, %v509, %v512
    %v514 = vsel %vm503, nan, %v513
    %515 = vst [vmem:[#allocation2] sm:$0xff] %v202
    %516 = vst [vmem:[#allocation2 + $0x8] sm:$0xff] %v306
    %517 = vst [vmem:[#allocation2 + $0x10] sm:$0xff] %v410
    %518 = vst [vmem:[#allocation2 + $0x18] sm:$0xff] %v514
    // Predicated region
    $region10: #{tpu_custom_call.1} parent=1 // pred_check
      _
    $region11: #{tpu_custom_call.1} parent=1 // pred_check_branch
      %520 = sbr.rel (0) target = $region13
    $region12: #{tpu_custom_call.1} parent=1 // pred_region
      %s522 = ssub.s32 512, 512
      %523 = vsyncadd [#allocation3], %s522
      %s524 = sshll.u32 [#allocation2], 4
      %s525 = int_to_ptr.vmem [resolvable:$true] %s524
      %530 = dma.vmem_to_hbm [thread:$0]  %s525, 512, %s2, [#allocation3], 128, 128, 8
    $region13: #{tpu_custom_call.1} parent=1 // pred_fallthru
      _
    // Predicated region
    $region14: #{tpu_custom_call.1} parent=1 // pred_check
      _
    $region15: #{tpu_custom_call.1} parent=1 // pred_check_branch
      %532 = sbr.rel (0) target = $region17
    $region16: #{tpu_custom_call.1} parent=1 // pred_region
      %533 = dma.done [#allocation3], 512
    $region17: #{tpu_custom_call.1} parent=1 // pred_fallthru
      _
    %534 = vsyncpa [#allocation3], 1

</llo_original>
